<compile_context>
chip_gen: v5e
topology: v5e:2x2
jax: 0.10.0
libtpu: 0.0.40
codegen_flags: <defaults>
</compile_context>

<pallas_src>
import functools

import jax
import jax.numpy as jnp
from jax.experimental import pallas as pl
from jax.experimental.pallas import tpu as pltpu


def _layernorm_kernel(x_ref, g_ref, o_ref, *, eps, stable, dim):
    # x_ref: (tile_rows, dim) block in VMEM; g_ref: (1, dim) f32.
    # Re-read x_ref per use instead of keeping a persistent f32 tile alive.
    inv_dim = jnp.float32(1.0 / dim)

    # Pass 1: mean.
    mean = jnp.sum(x_ref[...].astype(jnp.float32), axis=-1, keepdims=True) * inv_dim
    # Pass 2: centered variance (two-pass; VMEM-only re-read, numerically safe).
    centered = x_ref[...].astype(jnp.float32) - mean
    var = jnp.sum(centered * centered, axis=-1, keepdims=True) * inv_dim

    if stable:
        # Reference semantics: x <- x / amax(x), then LayerNorm. Fold the rescale into
        # per-row scalars (exact up to the eps term; LayerNorm is scale-invariant):
        #   rstd_eff = rsqrt(var * inv_amax^2 + eps) * inv_amax
        # Note: amax <= 0 yields inf/NaN rows, matching the reference's behavior.
        amax = jnp.max(x_ref[...].astype(jnp.float32), axis=-1, keepdims=True)
        inv_amax = pl.reciprocal(amax, approx=True)  # EUP slot, error ~O(eps*relerr)
        rstd = jax.lax.rsqrt(var * (inv_amax * inv_amax) + eps) * inv_amax
    else:
        rstd = jax.lax.rsqrt(var + eps)

    o_ref[...] = (
        (x_ref[...].astype(jnp.float32) - mean) * rstd * g_ref[...]
    ).astype(o_ref.dtype)


def _round_up(x, m):
    return ((x + m - 1) // m) * m


def _choose_tiling(rows, dim, x_dtype):
    """Largest sublane-friendly row tile that fits VMEM while keeping grid occupancy."""
    in_bytes = jnp.dtype(x_dtype).itemsize
    try:
        vmem_cap = int(pltpu.get_tpu_info().vmem_capacity_bytes)
    except Exception:
        vmem_cap = 64 * 1024 * 1024  # conservative (v7x-sized) fallback
    budget = vmem_cap // 3  # headroom for double-buffering + compiler scratch
    # per-row bytes: double-buffered input + output blocks, plus ~2 transient f32 rows
    # (no persistent f32 copy of the tile is kept in the kernel anymore).
    per_row = 4 * dim * in_bytes + 2 * dim * 4
    tile_rows = budget // max(per_row, 1)
    if tile_rows >= 16:
        tile_rows = (tile_rows // 16) * 16  # multiple of 16 -> clean bf16 sublane packing
    else:
        tile_rows = 8  # minimum sublane tile
        # TODO(synk): for very wide dims (>=32K on v7x's 64 MiB VMEM) add a second grid
        # axis / dim-chunked accumulation instead of relying on an 8-row tile.
    tile_rows = min(tile_rows, 1024)  # per-step overhead fully amortized by here
    # Grid-occupancy cap: aim for >= ~8 grid steps (pipelining + v7x megacore) but never
    # push medium row counts below the 256-1024 roofline sweet spot (v6e measurements).
    occupancy_cap = max(256, _round_up(pl.cdiv(rows, 8), 16))
    tile_rows = min(tile_rows, occupancy_cap)
    tile_rows = min(tile_rows, _round_up(rows, 8))  # never exceed (rounded-up) row count
    tile_rows = max(tile_rows, 8)
    # scoped-VMEM limit: estimated usage with 2x headroom, clipped to 3/4 of physical
    # capacity so the compiler keeps scratch headroom (matters most on v7x).
    usage = tile_rows * per_row + 4 * dim * 4
    vmem_limit = int(min(vmem_cap * 3 // 4, max(usage * 2, 32 * 1024 * 1024)))
    return int(tile_rows), vmem_limit


def layer_norm(x, g, *, eps=1e-05, fp16_eps=1e-03, stable=False, tile_rows=None):
    """Pallas LayerNorm matching the PyTorch module's forward semantics."""
    # eps selection mirrors: eps if x.dtype == torch.float32 else fp16_eps
    # (note: this applies fp16_eps to bf16 inputs too, as in the reference module).
    eff_eps = eps if x.dtype == jnp.float32 else fp16_eps

    orig_shape = x.shape
    dim = orig_shape[-1]
    rows = 1
    for s in orig_shape[:-1]:
        rows *= s
    x2 = x.reshape(rows, dim)
    g2 = g.reshape(1, dim).astype(jnp.float32)  # cast once in the wrapper, not per step

    auto_rows, vmem_limit = _choose_tiling(rows, dim, x.dtype)
    if tile_rows is None:
        tile_rows = auto_rows

    kernel = functools.partial(_layernorm_kernel, eps=eff_eps, stable=stable, dim=dim)

    # No pre-padding / post-slice: Pallas masks writes of the (possibly partial) edge block.
    grid = (pl.cdiv(rows, tile_rows),)

    out = pl.pallas_call(
        kernel,
        out_shape=jax.ShapeDtypeStruct((rows, dim), x.dtype),
        grid_spec=pltpu.PrefetchScalarGridSpec(
            num_scalar_prefetch=0,
            grid=grid,
            in_specs=[
                pl.BlockSpec((tile_rows, dim), lambda i: (i, 0)),
                pl.BlockSpec((1, dim), lambda i: (0, 0)),
            ],
            out_specs=pl.BlockSpec((tile_rows, dim), lambda i: (i, 0)),
        ),
        compiler_params=pltpu.CompilerParams(
            dimension_semantics=("parallel",),  # row axis shards across both TCs on v7x
            vmem_limit_bytes=vmem_limit,
        ),
    )(x2, g2)

    return out.reshape(orig_shape)


def _reference(x, g, *, eps=1e-05, fp16_eps=1e-03, stable=False):
    eff_eps = eps if x.dtype == jnp.float32 else fp16_eps
    xf = x.astype(jnp.float32)
    if stable:
        xf = xf / jnp.max(xf, axis=-1, keepdims=True)
    mean = jnp.mean(xf, axis=-1, keepdims=True)
    var = jnp.mean((xf - mean) ** 2, axis=-1, keepdims=True)
    return ((xf - mean) * jax.lax.rsqrt(var + eff_eps) * g.astype(jnp.float32)).astype(x.dtype)


if __name__ == "__main__":
    key = jax.random.PRNGKey(0)
    batch, seq, hidden = 2, 8, 128  # dim multiple of 128 -> lane-dense output stores
    x = jax.random.normal(key, (batch, seq, hidden), dtype=jnp.float32)

    # deterministic parameter init: g = ones(dim), as in nn.Parameter(torch.ones(dim))
    g = jnp.ones((hidden,), dtype=jnp.float32)

    out = jax.block_until_ready(layer_norm(x, g, stable=False))
    ref = _reference(x, g, stable=False)
    assert out.shape == x.shape and out.dtype == x.dtype
    assert jnp.allclose(out, ref, atol=5e-5, rtol=5e-5)

    # stable=True path (per-row folded rescale + EUP approx reciprocal)
    out_s = jax.block_until_ready(layer_norm(x, g, stable=True))
    ref_s = _reference(x, g, stable=True)
    assert jnp.allclose(out_s, ref_s, atol=5e-5, rtol=5e-5)

    # small dim (masked lane stores) + rows not a multiple of the tile + multi-step grid
    hidden2 = 32
    g2 = jnp.ones((hidden2,), dtype=jnp.float32)
    x3 = jax.random.normal(jax.random.PRNGKey(1), (3, 5, hidden2), dtype=jnp.float32)
    out3 = jax.block_until_ready(layer_norm(x3, g2, stable=False, tile_rows=8))
    ref3 = _reference(x3, g2, stable=False)
    assert out3.shape == x3.shape
    assert jnp.allclose(out3, ref3, atol=5e-5, rtol=5e-5)

    print("KERNEL_OK")
</pallas_src>

<mosaic_0001>
module attributes {stable_mosaic.version = 11 : i64} {
  func.func @_layernorm_kernel(%arg0: i32, %arg1: memref<16x128xf32, #tpu.memory_space<vmem>>, %arg2: memref<1x128xf32, #tpu.memory_space<vmem>>, %arg3: memref<16x128xf32, #tpu.memory_space<vmem>>) attributes {dimension_semantics = [#tpu.dimension_semantics<parallel>], iteration_bounds = array<i64: 1>, scalar_prefetch = 0 : i64, scratch_operands = 0 : i64, tpu.core_type = #tpu.core_type<tc>, window_params = [{transform_indices = @transform_0, window_bounds = array<i64: 16, 128>}, {pipeline_mode = #tpu.pipeline_mode<synchronous>, transform_indices = @transform_1, window_bounds = array<i64: 1, 128>}, {transform_indices = @transform_2, window_bounds = array<i64: 16, 128>}]} {
    %c0 = arith.constant 0 : index
    %c0_0 = arith.constant 0 : index
    %0 = vector.load %arg1[%c0, %c0_0] : memref<16x128xf32, #tpu.memory_space<vmem>>, vector<16x128xf32>
    %cst = arith.constant dense<0.000000e+00> : vector<16xf32>
    %1 = vector.multi_reduction <add>, %0, %cst [1] : vector<16x128xf32> to vector<16xf32>
    %2 = vector.shape_cast %1 : vector<16xf32> to vector<16x1xf32>
    %cst_1 = arith.constant 7.812500e-03 : f32
    %3 = vector.broadcast %cst_1 : f32 to vector<16x1xf32>
    %4 = arith.mulf %2, %3 : vector<16x1xf32>
    %c0_2 = arith.constant 0 : index
    %c0_3 = arith.constant 0 : index
    %5 = vector.load %arg1[%c0_2, %c0_3] : memref<16x128xf32, #tpu.memory_space<vmem>>, vector<16x128xf32>
    %6 = vector.broadcast %4 : vector<16x1xf32> to vector<16x128xf32>
    %7 = arith.subf %5, %6 : vector<16x128xf32>
    %8 = arith.mulf %7, %7 : vector<16x128xf32>
    %cst_4 = arith.constant dense<0.000000e+00> : vector<16xf32>
    %9 = vector.multi_reduction <add>, %8, %cst_4 [1] : vector<16x128xf32> to vector<16xf32>
    %10 = vector.shape_cast %9 : vector<16xf32> to vector<16x1xf32>
    %cst_5 = arith.constant 7.812500e-03 : f32
    %11 = vector.broadcast %cst_5 : f32 to vector<16x1xf32>
    %12 = arith.mulf %10, %11 : vector<16x1xf32>
    %cst_6 = arith.constant 9.99999974E-6 : f32
    %13 = vector.broadcast %cst_6 : f32 to vector<16x1xf32>
    %14 = arith.addf %12, %13 : vector<16x1xf32>
    %15 = math.rsqrt %14 : vector<16x1xf32>
    %c0_7 = arith.constant 0 : index
    %c0_8 = arith.constant 0 : index
    %16 = vector.load %arg1[%c0_7, %c0_8] : memref<16x128xf32, #tpu.memory_space<vmem>>, vector<16x128xf32>
    %17 = vector.broadcast %4 : vector<16x1xf32> to vector<16x128xf32>
    %18 = arith.subf %16, %17 : vector<16x128xf32>
    %19 = vector.broadcast %15 : vector<16x1xf32> to vector<16x128xf32>
    %20 = arith.mulf %18, %19 : vector<16x128xf32>
    %c0_9 = arith.constant 0 : index
    %c0_10 = arith.constant 0 : index
    %21 = vector.load %arg2[%c0_9, %c0_10] : memref<1x128xf32, #tpu.memory_space<vmem>>, vector<1x128xf32>
    %22 = vector.broadcast %21 : vector<1x128xf32> to vector<16x128xf32>
    %23 = arith.mulf %20, %22 : vector<16x128xf32>
    %c0_11 = arith.constant 0 : index
    %c0_12 = arith.constant 0 : index
    %24 = vector.load %arg3[%c0_11, %c0_12] : memref<16x128xf32, #tpu.memory_space<vmem>>, vector<16x128xf32>
    tpu.vector_store %arg3[%c0_11, %c0_12], %23 {strides = array<i32>} : memref<16x128xf32, #tpu.memory_space<vmem>>, vector<16x128xf32>,
    return
  }
  func.func @transform_0(%arg0: i32) -> (i32, i32) {
    %c0_i32 = arith.constant 0 : i32
    %c0_i32_0 = arith.constant 0 : i32
    return %arg0, %c0_i32 : i32, i32
  }
  func.func @transform_1(%arg0: i32) -> (i32, i32) {
    %c0_i32 = arith.constant 0 : i32
    %c0_i32_0 = arith.constant 0 : i32
    %c0_i32_1 = arith.constant 0 : i32
    return %c0_i32, %c0_i32_0 : i32, i32
  }
  func.func @transform_2(%arg0: i32) -> (i32, i32) {
    %c0_i32 = arith.constant 0 : i32
    %c0_i32_0 = arith.constant 0 : i32
    return %arg0, %c0_i32 : i32, i32
  }
}

</mosaic_0001>

<llo_original>
// kernel: tpu_custom_call.1
$region0: #{tpu_custom_call.1}
  #allocation0 [shape = 'u32[]', space=smem, size = 0x4, offset = 0x4, fixed_abs, tag = 'smem constant byte address 0x4 - core index']
  #allocation1 [shape = 'u32[72,128]{1,0:T(1,128)}', space=vmem, size = 0x9000, scoped, tag = 'internal scratch']
  %s0 = inlined_call_operand.hbm [shape: f32[16,128], index: 0, kind: input, shape index: {}]
  %s1 = inlined_call_operand.hbm [shape: f32[1,128], index: 1, kind: input, shape index: {}]
  %s2 = inlined_call_operand.hbm [shape: f32[16,128], index: 2, kind: output, shape index: {}]
  %s3 = sld [smem:[#allocation0]]
  $region26: #{tpu_custom_call.1} parent=0
    _
  %s5 = ssub.s32 1, %s3
  %s6 = scalar_select 0, %s5, %s3
  $region1: #{tpu_custom_call.1} parent=0
    #allocation2 [shape = 'u8[8192]{0}', space=vmem, size = 0x2000, scoped, tag = 'input window, operand 0, single buffered']
    #allocation3 [shape = 's32[1]{0}', space=sflag, size = 0x4, scoped, tag = 'scoped memory for tpu_custom_call.1']
    #allocation4 [shape = 's32[1]{0}', space=sflag, size = 0x4, scoped, tag = 'scoped memory for tpu_custom_call.1']
    #allocation5 [shape = 'u8[512]{0}', space=vmem, size = 0x400, scoped, tag = 'input window, operand 1, single buffered']
    #allocation6 [shape = 's32[1]{0}', space=sflag, size = 0x4, scoped, tag = 'scoped memory for tpu_custom_call.1']
    #allocation7 [shape = 'u8[8192]{0}', space=vmem, size = 0x2000, scoped, tag = 'output window, operand 0, single buffered']
    %7 = vsyncpa [#allocation3], 0
    %8 = vsyncpa [#allocation6], 0
    %9 = vsyncpa [#allocation4], 0
    // Predicated region
    $region2: #{tpu_custom_call.1} parent=1 // pred_check
      _
    $region3: #{tpu_custom_call.1} parent=1 // pred_check_branch
      %11 = sbr.rel (0) target = $region5
    $region4: #{tpu_custom_call.1} parent=1 // pred_region
      %13 = vsyncadd [#allocation3], 0
      %s14 = sshll.u32 %s0, 4
      %s15 = int_to_ptr.hbm [resolvable:$true] %s14
      %s16 = sshll.u32 [#allocation2], 4
      %s17 = int_to_ptr.vmem [resolvable:$true] %s16
      %22 = dma.hbm_to_vmem [thread:$0]  %s15, 256, %s17, [#allocation3], 128, 128, 8
    $region5: #{tpu_custom_call.1} parent=1 // pred_fallthru
      _
    // Predicated region
    $region6: #{tpu_custom_call.1} parent=1 // pred_check
      _
    $region7: #{tpu_custom_call.1} parent=1 // pred_check_branch
      %24 = sbr.rel (0) target = $region9
    $region8: #{tpu_custom_call.1} parent=1 // pred_region
      %26 = vsyncadd [#allocation6], 0
      %s28 = sshll.u32 %s1, 4
      %s29 = int_to_ptr.hbm [resolvable:$true] %s28
      %s30 = sshll.u32 [#allocation5], 4
      %s31 = int_to_ptr.vmem [resolvable:$true] %s30
      %33 = dma.hbm_to_vmem [thread:$0]  %s29, 16, %s31, [#allocation6]
    $region9: #{tpu_custom_call.1} parent=1 // pred_fallthru
      _
    // Predicated region
    $region10: #{tpu_custom_call.1} parent=1 // pred_check
      _
    $region11: #{tpu_custom_call.1} parent=1 // pred_check_branch
      %35 = sbr.rel (0) target = $region13
    $region12: #{tpu_custom_call.1} parent=1 // pred_region
      %37 = dma.done [#allocation3], 256
    $region13: #{tpu_custom_call.1} parent=1 // pred_fallthru
      _
    // Predicated region
    $region14: #{tpu_custom_call.1} parent=1 // pred_check
      _
    $region15: #{tpu_custom_call.1} parent=1 // pred_check_branch
      %39 = sbr.rel (0) target = $region17
    $region16: #{tpu_custom_call.1} parent=1 // pred_region
      %41 = dma.done [#allocation6], 16
    $region17: #{tpu_custom_call.1} parent=1 // pred_fallthru
      _
    %v42 = vld [vmem:[#allocation2] sm:$0xff]
    %v43 = vld [vmem:[#allocation2 + $0x8] sm:$0xff]
    %44 = vadd.xlane.f32.xlu0 %v42
    %v45 = vpop.xlane.xlu0 %44
    %46 = vadd.xlane.f32.xlu0 %v43
    %v47 = vpop.xlane.xlu0 %46
    %v48 = vmul.f32 %v45, 0.0078125
    %v49 = vmul.f32 %v47, 0.0078125
    %v50 = vsub.f32 %v42, %v48
    %v51 = vsub.f32 %v43, %v49
    %v52 = vmul.f32 %v50, %v50
    %v53 = vmul.f32 %v51, %v51
    %54 = vadd.xlane.f32.xlu0 %v52
    %v55 = vpop.xlane.xlu0 %54
    %56 = vadd.xlane.f32.xlu0 %v53
    %v57 = vpop.xlane.xlu0 %56
    %v58 = vmul.f32 %v55, 0.0078125
    %v59 = vmul.f32 %v57, 0.0078125
    %v60 = vadd.f32 %v58, 1e-05
    %v61 = vadd.f32 %v59, 1e-05
    %v62 = vrsqrt.pop %v60
    %v63 = vmul.f32 %v62, %v60
    %v64 = vmul.f32 %v63, %v62
    %v65 = vmul.f32 0.5, %v64
    %v66 = vsub.f32 1.5, %v65
    %v67 = vmul.f32 %v62, %v66
    %vm68 = vweird.f32 %v60
    %vm69 = vweird.f32 %v62
    %vm70 = vmor %vm68, %vm69
    %v71 = vsel %vm70, %v62, %v67
    %v72 = vrsqrt.pop %v61
    %v73 = vmul.f32 %v72, %v61
    %v74 = vmul.f32 %v73, %v72
    %v75 = vmul.f32 0.5, %v74
    %v76 = vsub.f32 1.5, %v75
    %v77 = vmul.f32 %v72, %v76
    %vm78 = vweird.f32 %v61
    %vm79 = vweird.f32 %v72
    %vm80 = vmor %vm78, %vm79
    %v81 = vsel %vm80, %v72, %v77
    %v82 = vmul.f32 %v50, %v71
    %v83 = vmul.f32 %v51, %v81
    %v84 = vld [vmem:[#allocation5] sm:$0x1]
    %v86 = vperm.slane %v84, 0
    %v88 = vmul.f32 %v82, %v86
    %v89 = vmul.f32 %v83, %v86
    %90 = vst [vmem:[#allocation7] sm:$0xff] %v88
    %91 = vst [vmem:[#allocation7 + $0x8] sm:$0xff] %v89
    // Predicated region
    $region18: #{tpu_custom_call.1} parent=1 // pred_check
      _
    $region19: #{tpu_custom_call.1} parent=1 // pred_check_branch
      %93 = sbr.rel (0) target = $region21
    $region20: #{tpu_custom_call.1} parent=1 // pred_region
      %95 = vsyncadd [#allocation4], 0
      %s96 = sshll.u32 [#allocation7], 4
      %s97 = int_to_ptr.vmem [resolvable:$true] %s96
      %s98 = sshll.u32 %s2, 4
      %s99 = int_to_ptr.hbm [resolvable:$true] %s98
      %104 = dma.vmem_to_hbm [thread:$0]  %s97, 256, %s99, [#allocation4], 128, 128, 8
    $region21: #{tpu_custom_call.1} parent=1 // pred_fallthru
      _
    // Predicated region
    $region22: #{tpu_custom_call.1} parent=1 // pred_check
      _
    $region23: #{tpu_custom_call.1} parent=1 // pred_check_branch
      %106 = sbr.rel (0) target = $region25
    $region24: #{tpu_custom_call.1} parent=1 // pred_region
      %108 = dma.done [#allocation4], 256
    $region25: #{tpu_custom_call.1} parent=1 // pred_fallthru
      _
    %109 = vsyncpa [#allocation3], 1
    %110 = vsyncpa [#allocation6], 1
    %111 = vsyncpa [#allocation4], 1

</llo_original>
